<compile_context>
chip_gen: v5e
topology: v5e:2x2
jax: 0.10.0
libtpu: 0.0.40
codegen_flags: <defaults>
</compile_context>

<pallas_src>
import functools
import math

import jax
import jax.numpy as jnp
from jax import lax
from jax.experimental import pallas as pl
from jax.experimental.pallas import tpu as pltpu


def _round_up(n, mult):
    return ((n + mult - 1) // mult) * mult


def _vmem_capacity_bytes():
    """Physical VMEM of the local TPU generation (conservative fallback)."""
    try:
        return int(pltpu.get_tpu_info().vmem_capacity_bytes)
    except Exception:
        return 64 * 1024 * 1024        # v7x per-TensorCore size: safe everywhere


def _choose_class_tile(n_classes, d, b_pad, w_itemsize, x_itemsize,
                       vmem_budget_bytes):
    """Largest class tile (multiple of 128) whose working set fits the budget.

    Counts the double-buffered weight stream and output tile *plus* the
    in-kernel temporaries (w*w tile, f32 raw-dot tile) and the lane padding of
    the feature axis, and keeps >= 2 grid steps when possible so the
    "parallel" class axis has work for both v7x TensorCores.
    """
    c128 = _round_up(n_classes, 128)
    d_lanes = _round_up(d, 128)                       # VMEM lane padding of D
    per_class = (2 * d_lanes * w_itemsize             # dbl-buffered weight tile
                 + 2 * b_pad * 4                      # dbl-buffered output tile
                 + d_lanes * w_itemsize               # w*w temporary
                 + 2 * b_pad * 4)                     # f32 raw dot + select temp
    fixed = 2 * (b_pad * d_lanes * x_itemsize         # resident activations
                 + 2 * b_pad * 4) + (1 << 20)         # labels/phi + slack
    avail = max(vmem_budget_bytes - fixed, per_class * 128)
    tc = (avail // per_class) // 128 * 128
    tc = int(max(128, min(tc, c128)))
    nblk = c128 // 128
    if nblk >= 2:                                     # keep >= 2 grid steps
        tc = min(tc, 128 * ((nblk + 1) // 2))
    return tc


def arc_margin_kernel(xs_ref, w_ref, label_ref, phi_ref, o_ref, *, eps):
    """One (B, TC) logits tile.

    xs_ref   : (B, D)   s * normalize(x), resident, compute dtype
    w_ref    : (TC, D)  raw weight tile (native dtype), streamed from HBM
    label_ref: (B, 1)   int32 target class, resident
    phi_ref  : (B, 1)   precomputed s*cos(acos(c)+m) target logits, resident
    o_ref    : (B, TC)  logits tile (lane-dense)
    """
    w = w_ref[...]                                                   # (TC, D)

    # raw = (s * xn) @ w^T, contracting dim 1 of both operands (MXU-native
    # layout, no transpose), accumulated in f32.
    raw = lax.dot_general(xs_ref[...], w,
                          dimension_numbers=(((1,), (1,)), ((), ())),
                          preferred_element_type=jnp.float32)        # (B, TC)

    # Per-class 1/||w|| as a lane-major (1, TC) row: reduce w*w over D with a
    # ones-row MXU contraction (avoids a sublane->lane relayout of a (TC, 1)
    # reduction) and take rsqrt on the EUP.
    ones_row = jnp.ones((1, w.shape[1]), dtype=w.dtype)
    sumsq = lax.dot_general(ones_row, w * w,
                            dimension_numbers=(((1,), (1,)), ((), ())),
                            preferred_element_type=jnp.float32)      # (1, TC)
    inv_norm = lax.rsqrt(jnp.maximum(sumsq, eps))
    logits = raw * inv_norm                                          # s * cosine

    # Swap in the precomputed target logit on the label column of this tile.
    b, tc = logits.shape
    col = pl.program_id(0) * tc + lax.broadcasted_iota(jnp.int32, (b, tc), 1)
    onehot = col == label_ref[...]                                   # (B, TC)
    o_ref[...] = jnp.where(onehot, phi_ref[...], logits).astype(o_ref.dtype)


def arc_margin_product(x, weight, label, s=64.0, m=0.5, *,
                       compute_dtype=jnp.bfloat16, out_dtype=jnp.float32,
                       class_tile=None):
    """ArcMarginProduct.forward: x (B, D), weight (C, D), label (B,) -> (B, C)."""
    B, D = x.shape
    C, D2 = weight.shape
    assert D == D2
    # NOTE: best HBM / VMEM / lane efficiency when D is a multiple of 128
    # (typical ArcFace D=512); small D (demo's 32) runs correctly but at
    # reduced lane occupancy.

    # --- grid-invariant preprocessing (hoisted out of the per-tile body) ----
    xf = x.astype(jnp.float32)
    xn = xf * lax.rsqrt(jnp.maximum(jnp.sum(xf * xf, -1, keepdims=True), 1e-24))

    # Target-column margin math, once per sample, in f32:
    #   phi = s * cos(acos(c) + m) = s * (c*cos(m) - sqrt(1-c^2)*sin(m)),
    # with 1-c^2 clamped at 0 so fp overshoot (|c| = 1 + ulp) cannot NaN.
    wl = weight[label].astype(jnp.float32)                           # (B, D)
    wln = wl * lax.rsqrt(jnp.maximum(jnp.sum(wl * wl, -1, keepdims=True), 1e-24))
    tcos = jnp.sum(xn * wln, -1, keepdims=True)                      # (B, 1)
    sine = jnp.sqrt(jnp.maximum(1.0 - tcos * tcos, 0.0))
    phi_s = (s * (tcos * math.cos(m) - sine * math.sin(m))).astype(jnp.float32)

    # Fold the scale s into the resident activations (deletes one VPU multiply
    # per output element from the kernel; s is a power of two, so exact).
    xs = (s * xn).astype(compute_dtype)
    w_stream = weight if weight.dtype == compute_dtype else weight.astype(compute_dtype)

    # --- padding & tiling ---------------------------------------------------
    sub = 16 if (jnp.dtype(compute_dtype).itemsize < 4
                 or jnp.dtype(out_dtype).itemsize < 4) else 8
    B_pad = _round_up(B, sub)

    vmem_cap = _vmem_capacity_bytes()
    if class_tile is None:
        tc = _choose_class_tile(C, D, B_pad,
                                jnp.dtype(compute_dtype).itemsize,
                                jnp.dtype(compute_dtype).itemsize,
                                vmem_budget_bytes=int(vmem_cap * 0.70))
    else:
        tc = _round_up(int(class_tile), 128)
    C_pad = _round_up(max(C, tc), tc)

    if B_pad != B:
        xs = jnp.pad(xs, ((0, B_pad - B), (0, 0)))
        phi_s = jnp.pad(phi_s, ((0, B_pad - B), (0, 0)))
    labels = label.astype(jnp.int32)
    if B_pad != B:
        labels = jnp.pad(labels, (0, B_pad - B), constant_values=-1)
    label2d = labels.reshape(B_pad, 1)
    if C_pad != C:
        # Zero rows: inv_norm saturates at rsqrt(eps) but the raw dot is 0, so
        # padded logits are exactly 0 and get sliced off below.
        w_stream = jnp.pad(w_stream, ((0, C_pad - C), (0, 0)))

    kern = functools.partial(arc_margin_kernel, eps=1e-24)

    out = pl.pallas_call(
        kern,
        out_shape=jax.ShapeDtypeStruct((B_pad, C_pad), out_dtype),
        grid=(C_pad // tc,),
        in_specs=[
            pl.BlockSpec((B_pad, D), lambda i: (0, 0)),   # s*xn: VMEM-resident
            pl.BlockSpec((tc, D), lambda i: (i, 0)),      # weight tile stream
            pl.BlockSpec((B_pad, 1), lambda i: (0, 0)),   # labels: resident
            pl.BlockSpec((B_pad, 1), lambda i: (0, 0)),   # target logits: resident
        ],
        out_specs=pl.BlockSpec((B_pad, tc), lambda i: (0, i)),  # lane-dense store
        compiler_params=pltpu.CompilerParams(
            dimension_semantics=("parallel",),            # shard class tiles on v7x cores
            vmem_limit_bytes=int(vmem_cap * 0.82)),
    )(xs, w_stream, label2d, phi_s)

    return out[:B, :C]


def arc_margin_reference(x, weight, label, s=64.0, m=0.5):
    xn = x / jnp.maximum(jnp.linalg.norm(x, axis=1, keepdims=True), 1e-12)
    wn = weight / jnp.maximum(jnp.linalg.norm(weight, axis=1, keepdims=True), 1e-12)
    cosine = xn @ wn.T
    B, C = cosine.shape
    m_hot = jnp.zeros((B, C), jnp.float32).at[jnp.arange(B), label].set(m)
    return jnp.cos(jnp.arccos(cosine) + m_hot) * s


if __name__ == "__main__":
    B = 6               # deliberately not a multiple of 8 (exercises batch padding)
    in_features = 32
    out_features = 300  # not a multiple of 128 (exercises class padding)

    key = jax.random.PRNGKey(0)
    kx, kw, kl = jax.random.split(key, 3)

    x = jax.random.normal(kx, (B, in_features), dtype=jnp.float32)
    # torch.nn.init.normal_(weight, mean=0.0, std=0.01)
    weight = 0.01 * jax.random.normal(kw, (out_features, in_features), dtype=jnp.float32)
    label = jax.random.randint(kl, (B,), 0, out_features, dtype=jnp.int32)

    ref = arc_margin_reference(x, weight, label, s=64.0, m=0.5)

    # Full-precision path; class_tile=128 forces a multi-step grid (tests the
    # per-tile class offset in the one-hot).
    out_f32 = arc_margin_product(x, weight, label, s=64.0, m=0.5,
                                 compute_dtype=jnp.float32, class_tile=128)
    out_f32 = jax.block_until_ready(out_f32)
    assert out_f32.shape == (B, out_features)
    assert jnp.allclose(out_f32, ref, atol=1e-2, rtol=1e-4), "f32 mismatch vs reference"

    # Production path: bf16 weight stream (half the HBM bytes) + bf16 MXU
    # operands with f32 accumulation; generation-aware auto class tile.  bf16
    # operand rounding (~2^-9 relative) scaled by s=64 bounds the logit error
    # well below 1.0 for unit-norm rows; target logits are exact f32 (hoisted).
    out_bf16 = arc_margin_product(x, weight.astype(jnp.bfloat16), label,
                                  s=64.0, m=0.5, compute_dtype=jnp.bfloat16)
    out_bf16 = jax.block_until_ready(out_bf16)
    assert out_bf16.shape == (B, out_features)
    assert jnp.max(jnp.abs(out_bf16 - ref)) < 1.0, "bf16 mismatch vs reference"

    print("KERNEL_OK")
</pallas_src>

<mosaic_0001>
module attributes {stable_mosaic.version = 11 : i64} {
  func.func @arc_margin_kernel(%arg0: i32, %arg1: memref<8x32xf32, #tpu.memory_space<vmem>>, %arg2: memref<128x32xf32, #tpu.memory_space<vmem>>, %arg3: memref<8x1xi32, #tpu.memory_space<vmem>>, %arg4: memref<8x1xf32, #tpu.memory_space<vmem>>, %arg5: memref<8x128xf32, #tpu.memory_space<vmem>>) attributes {dimension_semantics = [#tpu.dimension_semantics<parallel>], iteration_bounds = array<i64: 3>, scalar_prefetch = 0 : i64, scratch_operands = 0 : i64, tpu.core_type = #tpu.core_type<tc>, window_params = [{pipeline_mode = #tpu.pipeline_mode<synchronous>, transform_indices = @transform_0, window_bounds = array<i64: 8, 32>}, {transform_indices = @transform_1, window_bounds = array<i64: 128, 32>}, {pipeline_mode = #tpu.pipeline_mode<synchronous>, transform_indices = @transform_2, window_bounds = array<i64: 8, 1>}, {pipeline_mode = #tpu.pipeline_mode<synchronous>, transform_indices = @transform_3, window_bounds = array<i64: 8, 1>}, {transform_indices = @transform_4, window_bounds = array<i64: 8, 128>}]} {
    %c0 = arith.constant 0 : index
    %c0_0 = arith.constant 0 : index
    %0 = vector.load %arg2[%c0, %c0_0] : memref<128x32xf32, #tpu.memory_space<vmem>>, vector<128x32xf32>
    %c0_1 = arith.constant 0 : index
    %c0_2 = arith.constant 0 : index
    %1 = vector.load %arg1[%c0_1, %c0_2] : memref<8x32xf32, #tpu.memory_space<vmem>>, vector<8x32xf32>
    %cst = arith.constant dense<0.000000e+00> : vector<8x128xf32>
    %2 = tpu.matmul %1, %0, %cst {dimension_numbers = #tpu.dot_dimension_numbers<[1], [1], [0], [0], [0, 0, 1, 0], [], []>} : vector<8x32xf32>, vector<128x32xf32>, vector<8x128xf32> -> vector<8x128xf32>
    %cst_3 = arith.constant 1.000000e+00 : f32
    %3 = vector.broadcast %cst_3 : f32 to vector<1x32xf32>
    %4 = arith.mulf %0, %0 : vector<128x32xf32>
    %cst_4 = arith.constant dense<0.000000e+00> : vector<1x128xf32>
    %5 = tpu.matmul %3, %4, %cst_4 {dimension_numbers = #tpu.dot_dimension_numbers<[1], [1], [0], [0], [0, 0, 1, 0], [], []>} : vector<1x32xf32>, vector<128x32xf32>, vector<1x128xf32> -> vector<1x128xf32>
    %cst_5 = arith.constant 1.000000e-24 : f32
    %6 = vector.broadcast %cst_5 : f32 to vector<1x128xf32>
    %7 = arith.maximumf %5, %6 : vector<1x128xf32>
    %8 = math.rsqrt %7 : vector<1x128xf32>
    %9 = vector.broadcast %8 : vector<1x128xf32> to vector<8x128xf32>
    %10 = arith.mulf %2, %9 : vector<8x128xf32>
    %c128_i32 = arith.constant 128 : i32
    %11 = arith.muli %arg0, %c128_i32 : i32
    %12 = tpu.iota {dimensions = array<i32: 1>} : vector<8x128xi32>
    %13 = vector.broadcast %11 : i32 to vector<8x128xi32>
    %14 = arith.addi %13, %12 : vector<8x128xi32>
    %c0_6 = arith.constant 0 : index
    %c0_7 = arith.constant 0 : index
    %15 = vector.load %arg3[%c0_6, %c0_7] : memref<8x1xi32, #tpu.memory_space<vmem>>, vector<8x1xi32>
    %16 = vector.broadcast %15 : vector<8x1xi32> to vector<8x128xi32>
    %17 = arith.cmpi eq, %14, %16 : vector<8x128xi32>
    %c0_8 = arith.constant 0 : index
    %c0_9 = arith.constant 0 : index
    %18 = vector.load %arg4[%c0_8, %c0_9] : memref<8x1xf32, #tpu.memory_space<vmem>>, vector<8x1xf32>
    %19 = vector.shape_cast %18 : vector<8x1xf32> to vector<8x1xf32>
    %20 = vector.broadcast %19 : vector<8x1xf32> to vector<8x128xf32>
    %21 = arith.select %17, %20, %10 : vector<8x128xi1>, vector<8x128xf32>
    %c0_10 = arith.constant 0 : index
    %c0_11 = arith.constant 0 : index
    %22 = vector.load %arg5[%c0_10, %c0_11] : memref<8x128xf32, #tpu.memory_space<vmem>>, vector<8x128xf32>
    tpu.vector_store %arg5[%c0_10, %c0_11], %21 {strides = array<i32>} : memref<8x128xf32, #tpu.memory_space<vmem>>, vector<8x128xf32>,
    return
  }
  func.func @transform_0(%arg0: i32) -> (i32, i32) {
    %c0_i32 = arith.constant 0 : i32
    %c0_i32_0 = arith.constant 0 : i32
    %c0_i32_1 = arith.constant 0 : i32
    return %c0_i32, %c0_i32_0 : i32, i32
  }
  func.func @transform_1(%arg0: i32) -> (i32, i32) {
    %c0_i32 = arith.constant 0 : i32
    %c0_i32_0 = arith.constant 0 : i32
    return %arg0, %c0_i32 : i32, i32
  }
  func.func @transform_2(%arg0: i32) -> (i32, i32) {
    %c0_i32 = arith.constant 0 : i32
    %c0_i32_0 = arith.constant 0 : i32
    %c0_i32_1 = arith.constant 0 : i32
    return %c0_i32, %c0_i32_0 : i32, i32
  }
  func.func @transform_3(%arg0: i32) -> (i32, i32) {
    %c0_i32 = arith.constant 0 : i32
    %c0_i32_0 = arith.constant 0 : i32
    %c0_i32_1 = arith.constant 0 : i32
    return %c0_i32, %c0_i32_0 : i32, i32
  }
  func.func @transform_4(%arg0: i32) -> (i32, i32) {
    %c0_i32 = arith.constant 0 : i32
    %c0_i32_0 = arith.constant 0 : i32
    return %c0_i32, %arg0 : i32, i32
  }
}

</mosaic_0001>

<llo_original>
// kernel: tpu_custom_call.1
$region0: #{tpu_custom_call.1}
  #allocation0 [shape = 'u32[]', space=smem, size = 0x4, offset = 0x4, fixed_abs, tag = 'smem constant byte address 0x4 - core index']
  #allocation1 [shape = 'u32[72,128]{1,0:T(1,128)}', space=vmem, size = 0x9000, scoped, tag = 'internal scratch']
  %s0 = inlined_call_operand.vmem [shape: f32[8,32], index: 0, kind: input, shape index: {}]
  %s1 = inlined_call_operand.vmem [shape: f32[384,32], index: 1, kind: input, shape index: {}]
  %s2 = inlined_call_operand.vmem [shape: s32[8,1], index: 2, kind: input, shape index: {}]
  %s3 = inlined_call_operand.vmem [shape: f32[8,1], index: 3, kind: input, shape index: {}]
  %s4 = inlined_call_operand.hbm [shape: f32[8,384], index: 4, kind: output, shape index: {}]
  %s5 = sld [smem:[#allocation0]]
  $region49: #{tpu_custom_call.1} parent=0
    _
  %s7 = ssub.s32 1, %s5
  %s8 = scalar_select 0, %s7, %s5
  $region1: #{tpu_custom_call.1} parent=0
    #allocation2 [shape = 'u8[8192]{0}', space=vmem, size = 0x2000, scoped, tag = 'output window, operand 0']
    #allocation3 [shape = 's32[2]{0}', space=sflag, size = 0x8, scoped, tag = 'scoped memory for tpu_custom_call.1']
    %9 = vsyncpa [#allocation3], 0
    %s10 = scalar_lea.sflag [#allocation3], 1
    %11 = vsyncpa %s10, 0
    loop: start=0, step=1, limit=5
    $region2: #{tpu_custom_call.1} parent=1 // loop_pre_header
      _
    $region3: #{tpu_custom_call.1} parent=1 // loop_header
      %s13 = sphi 0, %s17
      %p14 = scmp.ge.s32.totalorder %s13, 5
      %s21 = sphi 0, %s21
      %s23 = sphi 0, %s21
      %s24 = sphi 0, %s23
      %s38 = sphi 0, %s24
      %s44 = sphi 0, %s46
      %s47 = sphi 0, %s44
      %s48 = sphi 0, %s47
      %s64 = sphi 0, %s48
      %s68 = sphi 0, %s68
      %s70 = sphi 0, %s68
      %s71 = sphi 0, %s70
      %s85 = sphi 0, %s71
      %s89 = sphi 0, %s89
      %s91 = sphi 0, %s89
      %s92 = sphi 0, %s91
      %s106 = sphi 0, %s92
      %s112 = sphi 0, %s114
      %s115 = sphi 0, %s112
      %s116 = sphi 0, %s115
      %s132 = sphi 0, %s116
    $region4: #{tpu_custom_call.1} parent=1 // loop_header_branch
      %16 = sbr.rel (%p14) target = $region8
    $region5: #{tpu_custom_call.1} parent=1 // loop_body
      %s18 = ssub.s32 %s13, 1
      %s19 = ssub.s32 %s13, 2
      %s20 = sadd.s32 %s13, 1
      %s22 = sadd.s32 %s21, 1
      %p25 = scmp.eq.s32.totalorder %s13, 2
      %p26 = scmp.ne.s32.totalorder %s21, %s23
      %p27 = scmp.eq.s32.totalorder %s13, 0
      %p28 = por %p26, %p27
      %p29 = scmp.ne.s32.totalorder %s21, %s23
      %p30 = scmp.eq.s32.totalorder %s18, 2
      %p31 = por %p29, %p30
      %p32 = scmp.ne.s32.totalorder %s23, %s24
      %p33 = scmp.eq.s32.totalorder %s18, 0
      %p34 = por %p32, %p33
      %p35 = scmp.ne.s32.totalorder %s23, %s24
      %p36 = scmp.eq.s32.totalorder %s19, 2
      %p37 = por %p35, %p36
      %p39 = scmp.ne.s32.totalorder %s24, %s38
      %p40 = scmp.eq.s32.totalorder %s19, 0
      %p41 = por %p39, %p40
      %s42 = ssub.s32 %s13, %s20
      %p43 = scmp.eq.s32.totalorder %s42, 0
      %s45 = sadd.s32 %s44, 1
      %s46 = scalar_select %p43, %s44, %s45
      %p49 = pneg %p43
      %p50 = scmp.eq.s32.totalorder %s13, 2
      %p51 = por %p49, %p50
      %p52 = scmp.ne.s32.totalorder %s44, %s47
      %p53 = scmp.eq.s32.totalorder %s13, 0
      %p54 = por %p52, %p53
      %p55 = scmp.ne.s32.totalorder %s44, %s47
      %p56 = scmp.eq.s32.totalorder %s18, 2
      %p57 = por %p55, %p56
      %p58 = scmp.ne.s32.totalorder %s47, %s48
      %p59 = scmp.eq.s32.totalorder %s18, 0
      %p60 = por %p58, %p59
      %p61 = scmp.ne.s32.totalorder %s47, %s48
      %p62 = scmp.eq.s32.totalorder %s19, 2
      %p63 = por %p61, %p62
      %p65 = scmp.ne.s32.totalorder %s48, %s64
      %p66 = scmp.eq.s32.totalorder %s19, 0
      %p67 = por %p65, %p66
      %s69 = sadd.s32 %s68, 1
      %p72 = scmp.eq.s32.totalorder %s13, 2
      %p73 = scmp.ne.s32.totalorder %s68, %s70
      %p74 = scmp.eq.s32.totalorder %s13, 0
      %p75 = por %p73, %p74
      %p76 = scmp.ne.s32.totalorder %s68, %s70
      %p77 = scmp.eq.s32.totalorder %s18, 2
      %p78 = por %p76, %p77
      %p79 = scmp.ne.s32.totalorder %s70, %s71
      %p80 = scmp.eq.s32.totalorder %s18, 0
      %p81 = por %p79, %p80
      %p82 = scmp.ne.s32.totalorder %s70, %s71
      %p83 = scmp.eq.s32.totalorder %s19, 2
      %p84 = por %p82, %p83
      %p86 = scmp.ne.s32.totalorder %s71, %s85
      %p87 = scmp.eq.s32.totalorder %s19, 0
      %p88 = por %p86, %p87
      %s90 = sadd.s32 %s89, 1
      %p93 = scmp.eq.s32.totalorder %s13, 2
      %p94 = scmp.ne.s32.totalorder %s89, %s91
      %p95 = scmp.eq.s32.totalorder %s13, 0
      %p96 = por %p94, %p95
      %p97 = scmp.ne.s32.totalorder %s89, %s91
      %p98 = scmp.eq.s32.totalorder %s18, 2
      %p99 = por %p97, %p98
      %p100 = scmp.ne.s32.totalorder %s91, %s92
      %p101 = scmp.eq.s32.totalorder %s18, 0
      %p102 = por %p100, %p101
      %p103 = scmp.ne.s32.totalorder %s91, %s92
      %p104 = scmp.eq.s32.totalorder %s19, 2
      %p105 = por %p103, %p104
      %p107 = scmp.ne.s32.totalorder %s92, %s106
      %p108 = scmp.eq.s32.totalorder %s19, 0
      %p109 = por %p107, %p108
      %s110 = ssub.s32 %s13, %s20
      %p111 = scmp.eq.s32.totalorder %s110, 0
      %s113 = sadd.s32 %s112, 1
      %s114 = scalar_select %p111, %s112, %s113
      %p117 = pneg %p111
      %p118 = scmp.eq.s32.totalorder %s13, 2
      %p119 = por %p117, %p118
      %p120 = scmp.ne.s32.totalorder %s112, %s115
      %p121 = scmp.eq.s32.totalorder %s13, 0
      %p122 = por %p120, %p121
      %p123 = scmp.ne.s32.totalorder %s112, %s115
      %p124 = scmp.eq.s32.totalorder %s18, 2
      %p125 = por %p123, %p124
      %p126 = scmp.ne.s32.totalorder %s115, %s116
      %p127 = scmp.eq.s32.totalorder %s18, 0
      %p128 = por %p126, %p127
      %p129 = scmp.ne.s32.totalorder %s115, %s116
      %p130 = scmp.eq.s32.totalorder %s19, 2
      %p131 = por %p129, %p130
      %p133 = scmp.ne.s32.totalorder %s116, %s132
      %p134 = scmp.eq.s32.totalorder %s19, 0
      %p135 = por %p133, %p134
      %p136 = scmp.le.s32.totalorder 1, %s13
      %p137 = scmp.lt.s32.totalorder %s13, 4
      %p138 = pnand %p136, %p137
      %p139 = pneg %p138
      // Predicated region
      $region9: #{tpu_custom_call.1} parent=5 // pred_check
        _
      $region10: #{tpu_custom_call.1} parent=5 // pred_check_branch
        %141 = sbr.rel (%p138) target = $region12
      $region11: #{tpu_custom_call.1} parent=5 // pred_region
        %s142 = ssub.s32 %s13, 1
        // Predicated region
        $region13: #{tpu_custom_call.1} parent=11 // pred_check
          %p143 = pneg %p34
        $region14: #{tpu_custom_call.1} parent=11 // pred_check_branch
          %145 = sbr.rel (%p143) target = $region16
        $region15: #{tpu_custom_call.1} parent=11 // pred_region
          _
        $region16: #{tpu_custom_call.1} parent=11 // pred_fallthru
          _
        // Predicated region
        $region17: #{tpu_custom_call.1} parent=11 // pred_check
          %p146 = pneg %p81
        $region18: #{tpu_custom_call.1} parent=11 // pred_check_branch
          %148 = sbr.rel (%p146) target = $region20
        $region19: #{tpu_custom_call.1} parent=11 // pred_region
          _
        $region20: #{tpu_custom_call.1} parent=11 // pred_fallthru
          _
        // Predicated region
        $region21: #{tpu_custom_call.1} parent=11 // pred_check
          %p149 = pneg %p102
        $region22: #{tpu_custom_call.1} parent=11 // pred_check_branch
          %151 = sbr.rel (%p149) target = $region24
        $region23: #{tpu_custom_call.1} parent=11 // pred_region
          _
        $region24: #{tpu_custom_call.1} parent=11 // pred_fallthru
          _
      $region12: #{tpu_custom_call.1} parent=5 // pred_fallthru
        _
      %p152 = scmp.lt.s32.totalorder %s13, 3
      // Predicated region
      $region25: #{tpu_custom_call.1} parent=5 // pred_check
        %p153 = pneg %p152
      $region26: #{tpu_custom_call.1} parent=5 // pred_check_branch
        %155 = sbr.rel (%p153) target = $region28
      $region27: #{tpu_custom_call.1} parent=5 // pred_region
        // Predicated region
        $region29: #{tpu_custom_call.1} parent=27 // pred_check
          %p156 = pneg %p54
        $region30: #{tpu_custom_call.1} parent=27 // pred_check_branch
          %158 = sbr.rel (%p156) target = $region32
        $region31: #{tpu_custom_call.1} parent=27 // pred_region
          %s159 = smul.u32 16, %s13
          %p160 = scmp.lt.s32.totalorder %s159, 47
          %s161 = scalar_select %p160, %s159, 47
          %s162 = smul.addr %s161, 8
          %s163 = scalar_lea.vmem %s1, %s162
          %s164 = smul.u32 16, %s13
        $region32: #{tpu_custom_call.1} parent=27 // pred_fallthru
          _
      $region28: #{tpu_custom_call.1} parent=5 // pred_fallthru
        _
      %p165 = scmp.le.s32.totalorder 1, %s13
      %p166 = scmp.lt.s32.totalorder %s13, 4
      %p167 = pnand %p165, %p166
      %p168 = pneg %p167
      // Predicated region
      $region33: #{tpu_custom_call.1} parent=5 // pred_check
        _
      $region34: #{tpu_custom_call.1} parent=5 // pred_check_branch
        %170 = sbr.rel (%p167) target = $region36
      $region35: #{tpu_custom_call.1} parent=5 // pred_region
        %s171 = ssub.s32 %s13, 1
        %p172 = pneg %p34
        %p173 = pneg %p31
        %s174 = smul.u32 16, %s18
        %p175 = scmp.lt.s32.totalorder %s174, 47
        %s176 = scalar_select %p175, %s174, 47
        %s177 = smul.addr %s176, 8
        %s178 = scalar_lea.vmem %s1, %s177
        %p179 = pneg %p60
        %p180 = pneg %p57
        %p181 = pneg %p81
        %p182 = pneg %p78
        %p183 = pneg %p102
        %p184 = pneg %p99
        %p185 = pneg %p128
        %p186 = pneg %p125
        %s187 = sand.u32 %s115, 1
        %s188 = scalar_lea.sflag [#allocation3], %s187
        %s189 = sand.u32 %s115, 1
        %s190 = smul.addr %s189, 8
        %s191 = scalar_lea.vmem [#allocation2], %s190
        %s192 = smul.u32 16, %s18
        %p193 = scmp.lt.s32.totalorder %s192, 47
        %s194 = scalar_select %p193, %s192, 47
        %s195 = smul.addr %s194, 8
        %s196 = scalar_lea.vmem %s1, %s195
        %s197 = smul.u32 16, %s18
        %v198 = vld [vmem:[%s196] sm:$0xff]
        %v199 = vld [vmem:[%s196 + $0x8] sm:$0xff]
        %v200 = vld [vmem:[%s196 + $0x10] sm:$0xff]
        %v201 = vld [vmem:[%s196 + $0x18] sm:$0xff]
        %v202 = vld [vmem:[%s196 + $0x20] sm:$0xff]
        %v203 = vld [vmem:[%s196 + $0x28] sm:$0xff]
        %v204 = vld [vmem:[%s196 + $0x30] sm:$0xff]
        %v205 = vld [vmem:[%s196 + $0x38] sm:$0xff]
        %v206 = vld [vmem:[%s196 + $0x40] sm:$0xff]
        %v207 = vld [vmem:[%s196 + $0x48] sm:$0xff]
        %v208 = vld [vmem:[%s196 + $0x50] sm:$0xff]
        %v209 = vld [vmem:[%s196 + $0x58] sm:$0xff]
        %v210 = vld [vmem:[%s196 + $0x60] sm:$0xff]
        %v211 = vld [vmem:[%s196 + $0x68] sm:$0xff]
        %v212 = vld [vmem:[%s196 + $0x70] sm:$0xff]
        %v213 = vld [vmem:[%s196 + $0x78] sm:$0xff]
        %v214 = vld [vmem:[%s0] sm:$0xff]
        %vm215 = vcmask 261120
        %v217 = vsel %vm215, %v214, 0
        %v220 = vsel %vm215, %v198, 0
        %v223 = vsel %vm215, %v199, 0
        %v226 = vsel %vm215, %v200, 0
        %v229 = vsel %vm215, %v201, 0
        %v232 = vsel %vm215, %v202, 0
        %v235 = vsel %vm215, %v203, 0
        %v238 = vsel %vm215, %v204, 0
        %v241 = vsel %vm215, %v205, 0
        %v244 = vsel %vm215, %v206, 0
        %v247 = vsel %vm215, %v207, 0
        %v250 = vsel %vm215, %v208, 0
        %v253 = vsel %vm215, %v209, 0
        %v256 = vsel %vm215, %v210, 0
        %v259 = vsel %vm215, %v211, 0
        %v262 = vsel %vm215, %v212, 0
        %v265 = vsel %vm215, %v213, 0
        %267 = vmatpush.xpose.msra.mxu0 %v265
        %268 = vmatpush.xpose.msra.mxu0 %v262
        %269 = vmatpush.xpose.msra.mxu0 %v259
        %270 = vmatpush.xpose.msra.mxu0 %v256
        %271 = vmatpush.xpose.msra.mxu0 %v253
        %272 = vmatpush.xpose.msra.mxu0 %v250
        %273 = vmatpush.xpose.msra.mxu0 %v247
        %274 = vmatpush.xpose.msra.mxu0 %v244
        %275 = vmatpush.xpose.msra.mxu0 %v241
        %276 = vmatpush.xpose.msra.mxu0 %v238
        %277 = vmatpush.xpose.msra.mxu0 %v235
        %278 = vmatpush.xpose.msra.mxu0 %v232
        %279 = vmatpush.xpose.msra.mxu0 %v229
        %280 = vmatpush.xpose.msra.mxu0 %v226
        %281 = vmatpush.xpose.msra.mxu0 %v223
        %282 = vmatpush.xpose.msra.mxu0 %v220
        %283 = vmatmul.f32.gmra.mxu0 %v217
        %v284 = vpop.f32.mrf.mxu0
        %v285 = vadd.f32 0.0, %v284
        %286 = vdwg.mxu0
        %v287 = vmul.f32 %v198, %v198
        %v288 = vmul.f32 %v199, %v199
        %v289 = vmul.f32 %v200, %v200
        %v290 = vmul.f32 %v201, %v201
        %v291 = vmul.f32 %v202, %v202
        %v292 = vmul.f32 %v203, %v203
        %v293 = vmul.f32 %v204, %v204
        %v294 = vmul.f32 %v205, %v205
        %v295 = vmul.f32 %v206, %v206
        %v296 = vmul.f32 %v207, %v207
        %v297 = vmul.f32 %v208, %v208
        %v298 = vmul.f32 %v209, %v209
        %v299 = vmul.f32 %v210, %v210
        %v300 = vmul.f32 %v211, %v211
        %v301 = vmul.f32 %v212, %v212
        %v302 = vmul.f32 %v213, %v213
        %v304 = vsel %vm215, 1.0, 0
        %v307 = vsel %vm215, %v287, 0
        %v310 = vsel %vm215, %v288, 0
        %v313 = vsel %vm215, %v289, 0
        %v316 = vsel %vm215, %v290, 0
        %v319 = vsel %vm215, %v291, 0
        %v322 = vsel %vm215, %v292, 0
        %v325 = vsel %vm215, %v293, 0
        %v328 = vsel %vm215, %v294, 0
        %v331 = vsel %vm215, %v295, 0
        %v334 = vsel %vm215, %v296, 0
        %v337 = vsel %vm215, %v297, 0
        %v340 = vsel %vm215, %v298, 0
        %v343 = vsel %vm215, %v299, 0
        %v346 = vsel %vm215, %v300, 0
        %v349 = vsel %vm215, %v301, 0
        %v352 = vsel %vm215, %v302, 0
        %354 = vmatpush.xpose.msra.mxu0 %v352
        %355 = vmatpush.xpose.msra.mxu0 %v349
        %356 = vmatpush.xpose.msra.mxu0 %v346
        %357 = vmatpush.xpose.msra.mxu0 %v343
        %358 = vmatpush.xpose.msra.mxu0 %v340
        %359 = vmatpush.xpose.msra.mxu0 %v337
        %360 = vmatpush.xpose.msra.mxu0 %v334
        %361 = vmatpush.xpose.msra.mxu0 %v331
        %362 = vmatpush.xpose.msra.mxu0 %v328
        %363 = vmatpush.xpose.msra.mxu0 %v325
        %364 = vmatpush.xpose.msra.mxu0 %v322
        %365 = vmatpush.xpose.msra.mxu0 %v319
        %366 = vmatpush.xpose.msra.mxu0 %v316
        %367 = vmatpush.xpose.msra.mxu0 %v313
        %368 = vmatpush.xpose.msra.mxu0 %v310
        %369 = vmatpush.xpose.msra.mxu0 %v307
        %370 = vmatmul.f32.gmra.mxu0 %v304
        %v371 = vpop.f32.mrf.mxu0
        %v372 = vadd.f32 0.0, %v371
        %373 = vdwg.mxu0
        %v374 = vmax.f32 %v372, 1e-24
        %v375 = vrsqrt.pop %v374
        %v376 = vmul.f32 %v375, %v374
        %v377 = vmul.f32 %v376, %v375
        %v378 = vmul.f32 0.5, %v377
        %v379 = vsub.f32 1.5, %v378
        %v380 = vmul.f32 %v375, %v379
        %vm381 = vweird.f32 %v374
        %vm382 = vweird.f32 %v375
        %vm383 = vmor %vm381, %vm382
        %v384 = vsel %vm383, %v375, %v380
        %v385 = vperm.slane %v384, 0
        %v386 = vmul.f32 %v285, %v385
        %s387 = smul.u32 %s18, 128
        %v388 = vlaneseq
        %v389 = vand.u32 %v388, 127
        %v390 = vstv %s387
        %v391 = vadd.s32 %v390, %v389
        %v392 = vld [vmem:[%s2] sm:$0xff]
        %393 = vset.pattern.permute.xlu0 0
        %394 = vperm.xlu0 %393, %v392
        %v395 = vpop.permute.xlu0 %394
        %vm396 = vcmp.eq.s32.totalorder %v391, %v395
        %v397 = vld [vmem:[%s3] sm:$0xff]
        %399 = vset.pattern.permute.xlu0 0
        %400 = vperm.xlu0 %399, %v397
        %v401 = vpop.permute.xlu0 %400
        %v403 = vsel %vm396, %v401, %v386
        %404 = vst [vmem:[%s191] sm:$0xff] %v403
        %s405 = sand.u32 %s115, 1
        %s406 = scalar_lea.sflag [#allocation3], %s405
        %s407 = sand.u32 %s115, 1
        %s408 = smul.addr %s407, 8
        %s409 = scalar_lea.vmem [#allocation2], %s408
        // Predicated region
        $region37: #{tpu_custom_call.1} parent=35 // pred_check
          %p410 = pneg %p125
        $region38: #{tpu_custom_call.1} parent=35 // pred_check_branch
          %412 = sbr.rel (%p410) target = $region40
        $region39: #{tpu_custom_call.1} parent=35 // pred_region
          %414 = vsyncadd %s406, 0
          %s415 = smul.addr %s18, 8
          %s416 = scalar_lea.hbm %s4, %s415
          %s418 = sshll.u32 %s409, 4
          %s419 = int_to_ptr.vmem [resolvable:$true] %s418
          %s420 = sshll.u32 %s416, 4
          %s421 = int_to_ptr.hbm [resolvable:$true] %s420
          %423 = dma.vmem_to_hbm [thread:$0]  %s419, 128, %s421, %s406
        $region40: #{tpu_custom_call.1} parent=35 // pred_fallthru
          _
      $region36: #{tpu_custom_call.1} parent=5 // pred_fallthru
        _
      %p424 = scmp.le.s32.totalorder 2, %s13
      // Predicated region
      $region41: #{tpu_custom_call.1} parent=5 // pred_check
        %p425 = pneg %p424
      $region42: #{tpu_custom_call.1} parent=5 // pred_check_branch
        %427 = sbr.rel (%p425) target = $region44
      $region43: #{tpu_custom_call.1} parent=5 // pred_region
        %s428 = ssub.s32 %s13, 2
        // Predicated region
        $region45: #{tpu_custom_call.1} parent=43 // pred_check
          %p429 = pneg %p131
        $region46: #{tpu_custom_call.1} parent=43 // pred_check_branch
          %431 = sbr.rel (%p429) target = $region48
        $region47: #{tpu_custom_call.1} parent=43 // pred_region
          %s432 = sand.u32 %s116, 1
          %s433 = scalar_lea.sflag [#allocation3], %s432
          %s434 = sand.u32 %s116, 1
          %s435 = smul.addr %s434, 8
          %s436 = scalar_lea.vmem [#allocation2], %s435
          %438 = dma.done %s433, 128
        $region48: #{tpu_custom_call.1} parent=43 // pred_fallthru
          _
      $region44: #{tpu_custom_call.1} parent=5 // pred_fallthru
        _
    $region6: #{tpu_custom_call.1} parent=1 // loop_footer
      %s17 = sadd.s32 1, %s13
    $region7: #{tpu_custom_call.1} parent=1 // loop_footer_branch
      %12 = sbr.rel target = $region3
    $region8: #{tpu_custom_call.1} parent=1 // loop_exit
      _
    %439 = vsyncpa [#allocation3], 1
    %s440 = scalar_lea.sflag [#allocation3], 1
    %441 = vsyncpa %s440, 1

</llo_original>
